<compile_context>
chip_gen: v5e
topology: v5e:2x2
jax: 0.10.0
libtpu: 0.0.40
codegen_flags: <defaults>
</compile_context>

<pallas_src>
import functools

import jax
import jax.numpy as jnp
from jax.experimental import pallas as pl
from jax.experimental.pallas import tpu as pltpu

_LANES = 128
_MAX_BLOCK_ROWS = 4096   # 2 MiB per f32 input tile; multiple of 16 (bf16 packing safe)


def _num_shards():
    """2 TensorCore shards on v7x, 1 on single-TC chips (v5e/v6e)."""
    try:
        kind = jax.devices()[0].device_kind.lower()
    except Exception:  # pragma: no cover
        return 1
    return 2 if "v7" in kind else 1


def _focal_loss_kernel(x_ref, t_ref, out_ref, acc_ref, *,
                       gamma, hard_labels, block_rows, blocks_per_shard,
                       first_masked_block, full_rows, rem_lanes,
                       needs_mask, small_acc):
    c = pl.program_id(0)   # core shard
    i = pl.program_id(1)   # block within shard (reduction axis)

    @pl.when(i == 0)
    def _():
        acc_ref[...] = jnp.zeros_like(acc_ref)

    x = x_ref[...].astype(jnp.float32)
    t = t_ref[...].astype(jnp.float32)

    # Stable BCE-with-logits: max(-x,0) + log(exp(-max)+exp(-x-max)) == max(-x,0)+log1p(exp(-|x|))
    lp = jnp.log1p(jnp.exp(-jnp.abs(x)))
    loss = x - x * t + jnp.maximum(-x, 0.0) + lp

    # logsigmoid(z) = min(z,0) - log1p(exp(-|z|));  z = -x*(2t-1)
    z = -x * (t * 2.0 - 1.0)
    if hard_labels:
        # t in {0,1} => |z| == |x| => reuse lp (saves 2 transcendentals/elem).
        invprobs = jnp.minimum(z, 0.0) - lp
    else:
        invprobs = jnp.minimum(z, 0.0) - jnp.log1p(jnp.exp(-jnp.abs(z)))

    loss = jnp.exp(invprobs * gamma) * loss

    def _accumulate(vals):
        if small_acc:
            # (block_rows,128) -> (block_rows//8, 8, 128): tile-aligned (free) reshape,
            # then a pure-VPU reduce over the leading dim into the small accumulator.
            acc_ref[...] += vals.reshape(-1, 8, _LANES).sum(axis=0)
        else:
            acc_ref[...] += vals

    if needs_mask:
        block_idx = c * blocks_per_shard + i

        @pl.when(block_idx < first_masked_block)
        def _():
            _accumulate(loss)

        @pl.when(block_idx >= first_masked_block)
        def _():
            # Mask by (global row, lane) so indices stay well inside int32 range.
            # Must remain a select (jnp.where): Pallas pads edge blocks with
            # undefined data, which is only safe in the unselected branch.
            grow = block_idx * block_rows + jax.lax.broadcasted_iota(
                jnp.int32, (block_rows, _LANES), 0)
            if rem_lanes:
                lane = jax.lax.broadcasted_iota(jnp.int32, (block_rows, _LANES), 1)
                valid = (grow < full_rows) | ((grow == full_rows) & (lane < rem_lanes))
            else:
                valid = grow < full_rows
            _accumulate(jnp.where(valid, loss, 0.0))
    else:
        _accumulate(loss)

    @pl.when(i == blocks_per_shard - 1)
    def _():
        out_ref[0, 0] = jnp.sum(acc_ref[...])


def focal_loss(outputs, targets, gamma=2.0, hard_labels=False,
               max_block_rows=_MAX_BLOCK_ROWS):
    if outputs.shape != targets.shape:
        raise ValueError(
            f"Targets and inputs must be same size. Got ({targets.shape}) and ({outputs.shape})"
        )
    if outputs.ndim < 2:
        raise ValueError("FocalLoss expects at least 2 dims (dim=1 is summed).")

    c_dim = outputs.shape[1]
    n = int(outputs.size)
    denom = n // c_dim  # loss.sum(dim=1).mean() == total_sum / (numel / C)

    # Lane-dense flat view; keep native dtype (kernel upcasts per tile).
    flat_o = outputs.reshape(-1)
    flat_t = targets.reshape(-1)

    # Only remaining wrapper copy: pad to the next multiple of 128 (needed for the
    # 2-D lane-dense view). <=127 elements; skipped entirely when already aligned.
    rows_total = -(-n // _LANES)
    pad = rows_total * _LANES - n
    if pad:
        flat_o = jnp.pad(flat_o, (0, pad))
        flat_t = jnp.pad(flat_t, (0, pad))

    o2 = flat_o.reshape(rows_total, _LANES)
    t2 = flat_t.reshape(rows_total, _LANES)

    num_shards = _num_shards()

    # Block either covers the whole array (legal: equals full dim) or is a large
    # multiple of 16 rows (legal for f32 and packed bf16 tiles).
    block_rows = rows_total if rows_total <= max_block_rows else max_block_rows
    block_elems = block_rows * _LANES

    blocks_real = -(-rows_total // block_rows)
    blocks_padded = -(-blocks_real // num_shards) * num_shards
    blocks_per_shard = blocks_padded // num_shards

    # Blocks with index >= first_masked_block contain elements past n (partial block,
    # 128-pad tail, or shard-rounding duplicates) and must be masked.
    first_masked_block = n // block_elems
    needs_mask = blocks_padded > first_masked_block

    small_acc = (block_rows % 8 == 0)
    acc_shape = (8, _LANES) if small_acc else (block_rows, _LANES)

    kernel = functools.partial(
        _focal_loss_kernel,
        gamma=float(gamma),
        hard_labels=bool(hard_labels),
        block_rows=block_rows,
        blocks_per_shard=blocks_per_shard,
        first_masked_block=first_masked_block,
        full_rows=n // _LANES,
        rem_lanes=n % _LANES,
        needs_mask=needs_mask,
        small_acc=small_acc,
    )

    last_real = blocks_real - 1
    if blocks_padded > blocks_real:
        # Shard rounding added logical blocks past the data: clamp their window to the
        # last real block; the in-kernel mask zeroes their contribution.
        def idx_map(c, i):
            return (jnp.minimum(c * blocks_per_shard + i, last_real), 0)
    else:
        def idx_map(c, i):
            return (c * blocks_per_shard + i, 0)

    in_spec = pl.BlockSpec((block_rows, _LANES), idx_map)

    if num_shards > 1:
        dim_sem = (pltpu.CORE_PARALLEL, pltpu.ARBITRARY)  # split shard axis across TCs (v7x)
    else:
        dim_sem = ("arbitrary", "arbitrary")

    partials = pl.pallas_call(
        kernel,
        out_shape=jax.ShapeDtypeStruct((num_shards, 1), jnp.float32),
        grid_spec=pltpu.PrefetchScalarGridSpec(
            num_scalar_prefetch=0,
            grid=(num_shards, blocks_per_shard),
            in_specs=[in_spec, in_spec],
            out_specs=pl.BlockSpec(
                (1, 1), lambda c, i: (c, 0),
                memory_space=pltpu.MemorySpace.SMEM,
            ),
            scratch_shapes=[pltpu.VMEM(acc_shape, jnp.float32)],
        ),
        compiler_params=pltpu.CompilerParams(dimension_semantics=dim_sem),
    )(o2, t2)

    return jnp.sum(partials) / jnp.float32(denom)


def _focal_loss_ref(outputs, targets, gamma=2.0):
    x = outputs.astype(jnp.float32)
    t = targets.astype(jnp.float32)
    max_val = jnp.maximum(-x, 0.0)
    log_ = jnp.log(jnp.exp(-max_val) + jnp.exp(-x - max_val))
    loss = x - x * t + max_val + log_
    invprobs = jax.nn.log_sigmoid(-x * (t * 2.0 - 1.0))
    loss = jnp.exp(invprobs * gamma) * loss
    return loss.sum(axis=1).mean()


if __name__ == "__main__":
    key = jax.random.PRNGKey(0)
    k1, k2, k3, k4, k5, k6 = jax.random.split(key, 6)

    # 1) NCHW, 128-aligned numel, binary targets -> hard-label fast path, single block.
    x = jax.random.normal(k1, (2, 4, 16, 16), dtype=jnp.float32) * 2.0
    tgt = (jax.random.uniform(k2, (2, 4, 16, 16)) > 0.5).astype(jnp.float32)
    got = jax.block_until_ready(focal_loss(x, tgt, gamma=2.0, hard_labels=True))
    want = jax.block_until_ready(_focal_loss_ref(x, tgt, gamma=2.0))
    assert jnp.allclose(got, want, rtol=1e-5, atol=1e-5), (got, want)

    # 2) Ragged shape, soft labels -> general path, 128-pad + in-kernel tail mask.
    x2 = jax.random.normal(k3, (2, 3, 7, 5), dtype=jnp.float32) * 2.0
    t2 = jax.random.uniform(k4, (2, 3, 7, 5)).astype(jnp.float32)
    got2 = jax.block_until_ready(focal_loss(x2, t2, gamma=2.0))
    want2 = jax.block_until_ready(_focal_loss_ref(x2, t2, gamma=2.0))
    assert jnp.allclose(got2, want2, rtol=1e-5, atol=1e-5), (got2, want2)

    # 3) Multi-block path (tiny max_block_rows): partial edge block, gated mask,
    #    small (8,128) accumulator with the per-step tile reduce.
    x3 = jax.random.normal(k5, (3, 5, 9, 9), dtype=jnp.float32) * 2.0
    t3 = (jax.random.uniform(k6, (3, 5, 9, 9)) > 0.5).astype(jnp.float32)
    got3 = jax.block_until_ready(
        focal_loss(x3, t3, gamma=2.0, hard_labels=True, max_block_rows=8))
    want3 = jax.block_until_ready(_focal_loss_ref(x3, t3, gamma=2.0))
    assert jnp.allclose(got3, want3, rtol=1e-5, atol=1e-5), (got3, want3)

    print("KERNEL_OK")
</pallas_src>

<mosaic_0001>
module attributes {stable_mosaic.version = 11 : i64} {
  func.func @_focal_loss_kernel(%arg0: i32, %arg1: i32, %arg2: memref<16x128xf32, #tpu.memory_space<vmem>>, %arg3: memref<16x128xf32, #tpu.memory_space<vmem>>, %arg4: memref<1x1xf32, #tpu.memory_space<smem>>, %arg5: memref<8x128xf32, #tpu.memory_space<vmem>>) attributes {dimension_semantics = [#tpu.dimension_semantics<arbitrary>, #tpu.dimension_semantics<arbitrary>], iteration_bounds = array<i64: 1, 1>, scalar_prefetch = 0 : i64, scratch_operands = 1 : i64, tpu.core_type = #tpu.core_type<tc>, window_params = [{transform_indices = @transform_0, window_bounds = array<i64: 16, 128>}, {transform_indices = @transform_1, window_bounds = array<i64: 16, 128>}, {transform_indices = @transform_2, window_bounds = array<i64: 1, 1>}]} {
    %c0_i32 = arith.constant 0 : i32
    %0 = arith.cmpi eq, %arg1, %c0_i32 : i32
    %1 = arith.extui %0 : i1 to i32
    %c0_i32_0 = arith.constant 0 : i32
    %2 = arith.cmpi ne, %1, %c0_i32_0 : i32
    scf.if %2 {
      %cst_18 = arith.constant 0.000000e+00 : f32
      %40 = vector.broadcast %cst_18 : f32 to vector<8x128xf32>
      %c0_19 = arith.constant 0 : index
      %c0_20 = arith.constant 0 : index
      %41 = vector.load %arg5[%c0_19, %c0_20] : memref<8x128xf32, #tpu.memory_space<vmem>>, vector<8x128xf32>
      tpu.vector_store %arg5[%c0_19, %c0_20], %40 {strides = array<i32>} : memref<8x128xf32, #tpu.memory_space<vmem>>, vector<8x128xf32>,
    } else {
    }
    %c0 = arith.constant 0 : index
    %c0_1 = arith.constant 0 : index
    %3 = vector.load %arg2[%c0, %c0_1] : memref<16x128xf32, #tpu.memory_space<vmem>>, vector<16x128xf32>
    %c0_2 = arith.constant 0 : index
    %c0_3 = arith.constant 0 : index
    %4 = vector.load %arg3[%c0_2, %c0_3] : memref<16x128xf32, #tpu.memory_space<vmem>>, vector<16x128xf32>
    %5 = math.absf %3 : vector<16x128xf32>
    %cst = arith.constant 0.000000e+00 : f32
    %6 = vector.broadcast %cst : f32 to vector<16x128xf32>
    %7 = arith.subf %6, %5 : vector<16x128xf32>
    %8 = math.exp %7 : vector<16x128xf32>
    %9 = math.log1p %8 : vector<16x128xf32>
    %10 = arith.mulf %3, %4 : vector<16x128xf32>
    %11 = arith.subf %3, %10 : vector<16x128xf32>
    %cst_4 = arith.constant 0.000000e+00 : f32
    %12 = vector.broadcast %cst_4 : f32 to vector<16x128xf32>
    %13 = arith.subf %12, %3 : vector<16x128xf32>
    %cst_5 = arith.constant 0.000000e+00 : f32
    %14 = vector.broadcast %cst_5 : f32 to vector<16x128xf32>
    %15 = arith.maximumf %13, %14 : vector<16x128xf32>
    %16 = arith.addf %11, %15 : vector<16x128xf32>
    %17 = arith.addf %16, %9 : vector<16x128xf32>
    %cst_6 = arith.constant 0.000000e+00 : f32
    %18 = vector.broadcast %cst_6 : f32 to vector<16x128xf32>
    %19 = arith.subf %18, %3 : vector<16x128xf32>
    %cst_7 = arith.constant 2.000000e+00 : f32
    %20 = vector.broadcast %cst_7 : f32 to vector<16x128xf32>
    %21 = arith.mulf %4, %20 : vector<16x128xf32>
    %cst_8 = arith.constant 1.000000e+00 : f32
    %22 = vector.broadcast %cst_8 : f32 to vector<16x128xf32>
    %23 = arith.subf %21, %22 : vector<16x128xf32>
    %24 = arith.mulf %19, %23 : vector<16x128xf32>
    %cst_9 = arith.constant 0.000000e+00 : f32
    %25 = vector.broadcast %cst_9 : f32 to vector<16x128xf32>
    %26 = arith.minimumf %24, %25 : vector<16x128xf32>
    %27 = arith.subf %26, %9 : vector<16x128xf32>
    %cst_10 = arith.constant 2.000000e+00 : f32
    %28 = vector.broadcast %cst_10 : f32 to vector<16x128xf32>
    %29 = arith.mulf %27, %28 : vector<16x128xf32>
    %30 = math.exp %29 : vector<16x128xf32>
    %31 = arith.mulf %30, %17 : vector<16x128xf32>
    %c0_11 = arith.constant 0 : index
    %c0_12 = arith.constant 0 : index
    %32 = vector.load %arg5[%c0_11, %c0_12] : memref<8x128xf32, #tpu.memory_space<vmem>>, vector<8x128xf32>
    %33 = vector.shape_cast %31 : vector<16x128xf32> to vector<2x8x128xf32>
    %cst_13 = arith.constant dense<0.000000e+00> : vector<8x128xf32>
    %34 = vector.multi_reduction <add>, %33, %cst_13 [0] : vector<2x8x128xf32> to vector<8x128xf32>
    %35 = arith.addf %32, %34 : vector<8x128xf32>
    %c0_14 = arith.constant 0 : index
    %c0_15 = arith.constant 0 : index
    %36 = vector.load %arg5[%c0_14, %c0_15] : memref<8x128xf32, #tpu.memory_space<vmem>>, vector<8x128xf32>
    tpu.vector_store %arg5[%c0_14, %c0_15], %35 {strides = array<i32>} : memref<8x128xf32, #tpu.memory_space<vmem>>, vector<8x128xf32>,
    %c0_i32_16 = arith.constant 0 : i32
    %37 = arith.cmpi eq, %arg1, %c0_i32_16 : i32
    %38 = arith.extui %37 : i1 to i32
    %c0_i32_17 = arith.constant 0 : i32
    %39 = arith.cmpi ne, %38, %c0_i32_17 : i32
    scf.if %39 {
      %c0_18 = arith.constant 0 : index
      %c0_19 = arith.constant 0 : index
      %40 = vector.load %arg5[%c0_18, %c0_19] : memref<8x128xf32, #tpu.memory_space<vmem>>, vector<8x128xf32>
      %41 = vector.shape_cast %40 : vector<8x128xf32> to vector<1x8x128xf32>
      %cst_20 = arith.constant dense<0.000000e+00> : vector<1xf32>
      %42 = vector.multi_reduction <add>, %41, %cst_20 [1, 2] : vector<1x8x128xf32> to vector<1xf32>
      %43 = vector.shape_cast %42 : vector<1xf32> to vector<1x1x1xf32>
      %44 = vector.extract %43[0, 0, 0] : f32 from vector<1x1x1xf32>
      %c0_21 = arith.constant 0 : index
      %c0_22 = arith.constant 0 : index
      %45 = memref.load %arg4[%c0_21, %c0_22] : memref<1x1xf32, #tpu.memory_space<smem>>
      memref.store %44, %arg4[%c0_21, %c0_22] : memref<1x1xf32, #tpu.memory_space<smem>>
    } else {
    }
    return
  }
  func.func @transform_0(%arg0: i32, %arg1: i32) -> (i32, i32) {
    %c1_i32 = arith.constant 1 : i32
    %0 = arith.muli %arg0, %c1_i32 : i32
    %1 = arith.addi %0, %arg1 : i32
    %c0_i32 = arith.constant 0 : i32
    %c0_i32_0 = arith.constant 0 : i32
    return %1, %c0_i32 : i32, i32
  }
  func.func @transform_1(%arg0: i32, %arg1: i32) -> (i32, i32) {
    %c1_i32 = arith.constant 1 : i32
    %0 = arith.muli %arg0, %c1_i32 : i32
    %1 = arith.addi %0, %arg1 : i32
    %c0_i32 = arith.constant 0 : i32
    %c0_i32_0 = arith.constant 0 : i32
    return %1, %c0_i32 : i32, i32
  }
  func.func @transform_2(%arg0: i32, %arg1: i32) -> (i32, i32) {
    %c0_i32 = arith.constant 0 : i32
    %c0_i32_0 = arith.constant 0 : i32
    return %arg0, %c0_i32 : i32, i32
  }
}

</mosaic_0001>

<llo_original>
// kernel: tpu_custom_call.1
$region0: #{tpu_custom_call.1}
  #allocation0 [shape = 'u32[]', space=smem, size = 0x4, offset = 0x4, fixed_abs, tag = 'smem constant byte address 0x4 - core index']
  #allocation1 [shape = 'u32[72,128]{1,0:T(1,128)}', space=vmem, size = 0x9000, scoped, tag = 'internal scratch']
  #allocation2 [shape = 'f32[8,128]{1,0:T(8,128)}', space=vmem, size = 0x1000, scoped, tag = 'scratch operand']
  %s0 = inlined_call_operand.hbm [shape: f32[16,128], index: 0, kind: input, shape index: {}]
  %s1 = inlined_call_operand.hbm [shape: f32[16,128], index: 1, kind: input, shape index: {}]
  %s2 = inlined_call_operand.hbm [shape: f32[1,1], index: 2, kind: output, shape index: {}]
  %s3 = sld [smem:[#allocation0]]
  $region34: #{tpu_custom_call.1} parent=0
    _
  %s5 = ssub.s32 1, %s3
  %s6 = scalar_select 0, %s5, %s3
  $region1: #{tpu_custom_call.1} parent=0
    #allocation3 [shape = 'u8[8192]{0}', space=vmem, size = 0x2000, scoped, tag = 'input window, operand 0, single buffered']
    #allocation4 [shape = 's32[1]{0}', space=sflag, size = 0x4, scoped, tag = 'scoped memory for tpu_custom_call.1']
    #allocation5 [shape = 's32[1]{0}', space=sflag, size = 0x4, scoped, tag = 'scoped memory for tpu_custom_call.1']
    #allocation6 [shape = 'u8[8192]{0}', space=vmem, size = 0x2000, scoped, tag = 'input window, operand 1, single buffered']
    #allocation7 [shape = 's32[1]{0}', space=sflag, size = 0x4, scoped, tag = 'scoped memory for tpu_custom_call.1']
    #allocation8 [shape = 'u8[512]{0}', space=smem, size = 0x200, scoped, tag = 'output window, operand 0, single buffered']
    %7 = vsyncpa [#allocation4], 0
    %8 = vsyncpa [#allocation7], 0
    %9 = vsyncpa [#allocation5], 0
    // Predicated region
    $region2: #{tpu_custom_call.1} parent=1 // pred_check
      _
    $region3: #{tpu_custom_call.1} parent=1 // pred_check_branch
      %11 = sbr.rel (0) target = $region5
    $region4: #{tpu_custom_call.1} parent=1 // pred_region
      %s12 = sadd.s32 0, 0
      %s13 = smul.u32 2, %s12
      %15 = vsyncadd [#allocation4], 0
      %s16 = smul.addr %s13, 8
      %s17 = scalar_lea.hbm %s0, %s16
      %s18 = sshll.u32 %s17, 4
      %s19 = int_to_ptr.hbm [resolvable:$true] %s18
      %s20 = sshll.u32 [#allocation3], 4
      %s21 = int_to_ptr.vmem [resolvable:$true] %s20
      %26 = dma.hbm_to_vmem [thread:$0]  %s19, 256, %s21, [#allocation4], 128, 128, 8
    $region5: #{tpu_custom_call.1} parent=1 // pred_fallthru
      _
    // Predicated region
    $region6: #{tpu_custom_call.1} parent=1 // pred_check
      _
    $region7: #{tpu_custom_call.1} parent=1 // pred_check_branch
      %28 = sbr.rel (0) target = $region9
    $region8: #{tpu_custom_call.1} parent=1 // pred_region
      %s29 = sadd.s32 0, 0
      %s30 = smul.u32 2, %s29
      %32 = vsyncadd [#allocation7], 0
      %s33 = smul.addr %s30, 8
      %s34 = scalar_lea.hbm %s1, %s33
      %s35 = sshll.u32 %s34, 4
      %s36 = int_to_ptr.hbm [resolvable:$true] %s35
      %s37 = sshll.u32 [#allocation6], 4
      %s38 = int_to_ptr.vmem [resolvable:$true] %s37
      %43 = dma.hbm_to_vmem [thread:$0]  %s36, 256, %s38, [#allocation7], 128, 128, 8
    $region9: #{tpu_custom_call.1} parent=1 // pred_fallthru
      _
    // Predicated region
    $region10: #{tpu_custom_call.1} parent=1 // pred_check
      _
    $region11: #{tpu_custom_call.1} parent=1 // pred_check_branch
      %45 = sbr.rel (0) target = $region13
    $region12: #{tpu_custom_call.1} parent=1 // pred_region
      %47 = dma.done [#allocation4], 256
    $region13: #{tpu_custom_call.1} parent=1 // pred_fallthru
      _
    // Predicated region
    $region14: #{tpu_custom_call.1} parent=1 // pred_check
      _
    $region15: #{tpu_custom_call.1} parent=1 // pred_check_branch
      %49 = sbr.rel (0) target = $region17
    $region16: #{tpu_custom_call.1} parent=1 // pred_region
      %51 = dma.done [#allocation7], 256
    $region17: #{tpu_custom_call.1} parent=1 // pred_fallthru
      _
    %s52 = sadd.s32 0, 0
    %s53 = smul.u32 2, %s52
    %s54 = sadd.s32 0, 0
    %s55 = smul.u32 2, %s54
    %p56 = scmp.eq.s32.totalorder 0, 0
    // Predicated region
    $region18: #{tpu_custom_call.1} parent=1 // pred_check
      %p57 = pneg %p56
    $region19: #{tpu_custom_call.1} parent=1 // pred_check_branch
      %59 = sbr.rel (%p57) target = $region21
    $region20: #{tpu_custom_call.1} parent=1 // pred_region
      %60 = vst [vmem:[#allocation2] sm:$0xff] 0.0
    $region21: #{tpu_custom_call.1} parent=1 // pred_fallthru
      _
    %v61 = vld [vmem:[#allocation3] sm:$0xff]
    %v62 = vld [vmem:[#allocation3 + $0x8] sm:$0xff]
    %v63 = vld [vmem:[#allocation6] sm:$0xff]
    %v64 = vld [vmem:[#allocation6 + $0x8] sm:$0xff]
    %v65 = vand.u32 2147483647, %v61
    %v66 = vand.u32 2147483647, %v62
    %v67 = vsub.f32 0.0, %v65
    %v68 = vsub.f32 0.0, %v66
    %v69 = vmul.f32 %v67, 1.442695
    %v70 = vpow.pop %v69
    %v71 = vmul.f32 %v68, 1.442695
    %v72 = vpow.pop %v71
    %v73 = vadd.f32 %v70, 1.0
    %v74 = vlog2.pop %v73
    %v75 = vmul.f32 %v74, 0.6931472
    %v76 = vmul.f32 -0.5, %v70
    %v77 = vadd.f32 %v76, 1.0
    %v78 = vmul.f32 %v77, %v70
    %v79 = vand.u32 2147483647, %v70
    %vm80 = vcmp.lt.f32.partialorder %v79, 0.0004427343
    %v81 = vsel %vm80, %v78, %v75
    %v82 = vadd.f32 %v72, 1.0
    %v83 = vlog2.pop %v82
    %v84 = vmul.f32 %v83, 0.6931472
    %v85 = vmul.f32 -0.5, %v72
    %v86 = vadd.f32 %v85, 1.0
    %v87 = vmul.f32 %v86, %v72
    %v88 = vand.u32 2147483647, %v72
    %vm89 = vcmp.lt.f32.partialorder %v88, 0.0004427343
    %v90 = vsel %vm89, %v87, %v84
    %v91 = vmul.f32 %v61, %v63
    %v92 = vmul.f32 %v62, %v64
    %v93 = vsub.f32 %v61, %v91
    %v94 = vsub.f32 %v62, %v92
    %v95 = vsub.f32 0.0, %v61
    %v96 = vsub.f32 0.0, %v62
    %v97 = vmax.f32 %v95, 0.0
    %v98 = vmax.f32 %v96, 0.0
    %v99 = vadd.f32 %v93, %v97
    %v100 = vadd.f32 %v94, %v98
    %v101 = vadd.f32 %v99, %v81
    %v102 = vadd.f32 %v100, %v90
    %v103 = vmul.f32 %v63, 2.0
    %v104 = vmul.f32 %v64, 2.0
    %v105 = vsub.f32 %v103, 1.0
    %v106 = vsub.f32 %v104, 1.0
    %v107 = vmul.f32 %v95, %v105
    %v108 = vmul.f32 %v96, %v106
    %v109 = vmin.f32 %v107, 0.0
    %v110 = vmin.f32 %v108, 0.0
    %v111 = vsub.f32 %v109, %v81
    %v112 = vsub.f32 %v110, %v90
    %v113 = vmul.f32 %v111, 2.0
    %v114 = vmul.f32 %v112, 2.0
    %v115 = vmul.f32 %v113, 1.442695
    %v116 = vpow.pop %v115
    %v117 = vmul.f32 %v114, 1.442695
    %v118 = vpow.pop %v117
    %v119 = vmul.f32 %v116, %v101
    %v120 = vmul.f32 %v118, %v102
    %v121 = vld [vmem:[#allocation2] sm:$0xff]
    %v122 = vadd.f32 %v119, %v120
    %v123 = vadd.f32 %v121, %v122
    %124 = vst [vmem:[#allocation2] sm:$0xff] %v123
    // Predicated region
    $region22: #{tpu_custom_call.1} parent=1 // pred_check
      %p125 = pneg %p56
    $region23: #{tpu_custom_call.1} parent=1 // pred_check_branch
      %127 = sbr.rel (%p125) target = $region25
    $region24: #{tpu_custom_call.1} parent=1 // pred_region
      %v128 = vld [vmem:[#allocation2] sm:$0xff]
      %129 = vadd.xlane.f32.xlu0 %v128
      %v130 = vpop.xlane.xlu0 %129
      %v131 = vrot.slane %v130, 4
      %v132 = vadd.f32 %v130, %v131
      %v133 = vrot.slane %v132, 2
      %v134 = vadd.f32 %v132, %v133
      %v135 = vrot.slane %v134, 1
      %v136 = vadd.f32 %v134, %v135
      %s137 = vtos %v136
      %s138 = scalar_lea.smem [#allocation8], 0
      %139 = sst [smem:[%s138]] %s137
    $region25: #{tpu_custom_call.1} parent=1 // pred_fallthru
      _
    // Predicated region
    $region26: #{tpu_custom_call.1} parent=1 // pred_check
      _
    $region27: #{tpu_custom_call.1} parent=1 // pred_check_branch
      %141 = sbr.rel (0) target = $region29
    $region28: #{tpu_custom_call.1} parent=1 // pred_region
      %143 = vsyncadd [#allocation5], 0
      %s145 = sshll.u32 %s2, 4
      %s146 = int_to_ptr.hbm [resolvable:$true] %s145
      %148 = dma.smem_to_hbm [#allocation8], 16, %s146, [#allocation5]
    $region29: #{tpu_custom_call.1} parent=1 // pred_fallthru
      _
    // Predicated region
    $region30: #{tpu_custom_call.1} parent=1 // pred_check
      _
    $region31: #{tpu_custom_call.1} parent=1 // pred_check_branch
      %150 = sbr.rel (0) target = $region33
    $region32: #{tpu_custom_call.1} parent=1 // pred_region
      %152 = dma.done [#allocation5], 16
    $region33: #{tpu_custom_call.1} parent=1 // pred_fallthru
      _
    %153 = sfence
    %154 = vsyncpa [#allocation4], 1
    %155 = vsyncpa [#allocation7], 1
    %156 = vsyncpa [#allocation5], 1

</llo_original>
